<compile_context>
chip_gen: v7x
topology: tpu7x:2x2x1
jax: 0.10.0
libtpu: 0.0.40
codegen_flags: <defaults>
</compile_context>

<pallas_src>
import functools

import jax
import jax.numpy as jnp
from jax.experimental import pallas as pl
from jax.experimental.pallas import tpu as pltpu


def _linear_kernel(x_ref, w_ref, b_ref, o_ref, *, compute_dtype):
    # x_ref : (TM, K)  activation tile (original dtype; cast in-kernel if bf16)
    # w_ref : (N, K)   weight in PyTorch (out, in) layout, VMEM-resident
    # b_ref : (1, N)   bias, f32, VMEM-resident
    # o_ref : (TM, N)  output tile (row-major, no wrapper transpose needed)
    x = x_ref[...].astype(compute_dtype)
    w = w_ref[...].astype(compute_dtype)
    acc = jax.lax.dot_general(
        x, w,
        dimension_numbers=(((1,), (1,)), ((), ())),   # contract K with K
        preferred_element_type=jnp.float32,           # f32 MXU accumulate
    )                                                 # -> (TM, N) f32
    o_ref[...] = (acc + b_ref[...]).astype(o_ref.dtype)   # bias add in f32


def multi_agent_value_net(latent_vf, weight, bias, *,
                          block_rows=8192,
                          use_bf16_matmul=False,
                          min_rows_for_pallas=8192,
                          out_dtype=None):
    """Forward equivalent to PyTorch nn.Linear: latent_vf @ weight.T + bias.

    latent_vf: (..., latent_dim)
    weight:    (output_dim, latent_dim)   -- PyTorch nn.Linear convention
    bias:      (output_dim,)
    returns:   (..., output_dim)
    """
    output_dim, latent_dim = weight.shape
    lead_shape = latent_vf.shape[:-1]
    out_dtype = latent_vf.dtype if out_dtype is None else out_dtype

    x2d = latent_vf.reshape(-1, latent_dim)            # (M, K)
    m = x2d.shape[0]

    # Small problems: pallas_call launch + custom-call fusion barrier dwarf
    # the few kFLOPs of work; a fused XLA matmul wins on every generation.
    if m < min_rows_for_pallas:
        out2d = (x2d @ weight.T + bias).astype(out_dtype)
        return out2d.reshape(*lead_shape, output_dim)

    b2d = bias.reshape(1, output_dim).astype(jnp.float32)

    # Row tile: multiple of 128, as large as block_rows allows (big DMAs,
    # amortized per-step overhead), clamped to the padded problem size.
    m_pad = pl.cdiv(m, 128) * 128
    tm = min(max(128, (block_rows // 128) * 128), m_pad)
    # Keep at least 2 grid steps when M allows it, so the "parallel" grid axis
    # can shard across both TensorCores on v7x (no-op cost on v5e/v6e).
    if m_pad >= 256:
        tm = min(tm, max(128, ((m_pad // 2) // 128) * 128))
    grid = (pl.cdiv(m, tm),)

    compute_dtype = jnp.bfloat16 if use_bf16_matmul else jnp.float32

    # Memory-dominated cost hint for XLA's scheduler.
    x_bytes = m * latent_dim * jnp.dtype(x2d.dtype).itemsize
    w_bytes = output_dim * latent_dim * jnp.dtype(weight.dtype).itemsize
    b_bytes = output_dim * 4
    o_bytes = m * output_dim * jnp.dtype(out_dtype).itemsize
    cost = pl.CostEstimate(
        flops=2 * m * latent_dim * output_dim,
        transcendentals=0,
        bytes_accessed=x_bytes + w_bytes + b_bytes + o_bytes,
    )

    out2d = pl.pallas_call(
        functools.partial(_linear_kernel, compute_dtype=compute_dtype),
        out_shape=jax.ShapeDtypeStruct((m, output_dim), out_dtype),
        grid=grid,
        in_specs=[
            pl.BlockSpec((tm, latent_dim), lambda i: (i, 0)),          # X tile
            pl.BlockSpec((output_dim, latent_dim), lambda i: (0, 0)),  # W resident
            pl.BlockSpec((1, output_dim), lambda i: (0, 0)),           # b resident
        ],
        out_specs=pl.BlockSpec((tm, output_dim), lambda i: (i, 0)),
        compiler_params=pltpu.CompilerParams(
            # Row tiles are independent -> shard across both TCs on v7x.
            dimension_semantics=("parallel",),
        ),
        cost_estimate=cost,
    )(x2d, weight, b2d)

    return out2d.reshape(*lead_shape, output_dim)


if __name__ == "__main__":
    # Module hyperparameters (small, consistent with the forward pass).
    latent_dim = 32
    output_dim = 16
    num_agents = 3
    batch = 2

    key = jax.random.PRNGKey(0)
    k_x, k_w, k_b, k_x2 = jax.random.split(key, 4)

    # Deterministic parameter init (mimics PyTorch nn.Linear uniform bound).
    bound = 1.0 / (latent_dim ** 0.5)
    weight = jax.random.uniform(
        k_w, (output_dim, latent_dim), jnp.float32, -bound, bound)
    bias = jax.random.uniform(
        k_b, (output_dim,), jnp.float32, -bound, bound)

    def ref_fn(x):
        return jnp.einsum("...k,ok->...o", x, weight,
                          precision=jax.lax.Precision.HIGHEST) + bias

    # --- Case A: module-typical small shape, forced through the Pallas path
    #             with f32 inputs (nn.Linear semantics). ---------------------
    x_small = jax.random.normal(
        k_x, (batch, num_agents, latent_dim), jnp.float32)
    out_a = multi_agent_value_net(x_small, weight, bias,
                                  min_rows_for_pallas=0)
    out_a = jax.block_until_ready(out_a)
    assert out_a.shape == (batch, num_agents, output_dim)
    assert jnp.allclose(out_a, ref_fn(x_small), atol=1e-2, rtol=1e-2)

    # --- Case B: larger row count -> multi-tile grid (M=512, TM=256, grid=2),
    #             f32 inputs streamed straight into the kernel. --------------
    big_batch, big_agents = 128, 4
    x_big = jax.random.normal(
        k_x2, (big_batch, big_agents, latent_dim), jnp.float32)
    out_b = multi_agent_value_net(x_big, weight, bias,
                                  block_rows=256, min_rows_for_pallas=0)
    out_b = jax.block_until_ready(out_b)
    assert out_b.shape == (big_batch, big_agents, output_dim)
    assert jnp.allclose(out_b, ref_fn(x_big), atol=1e-2, rtol=1e-2)

    # --- Case B2: optional in-kernel bf16 MXU path (opt-in, looser tol). ----
    out_b16 = multi_agent_value_net(x_big, weight, bias,
                                    block_rows=256, min_rows_for_pallas=0,
                                    use_bf16_matmul=True)
    out_b16 = jax.block_until_ready(out_b16)
    assert jnp.allclose(out_b16, ref_fn(x_big), atol=2e-2, rtol=2e-2)

    # --- Case C: default dispatch at tiny M takes the fused XLA fallback. ---
    out_c = jax.block_until_ready(multi_agent_value_net(x_small, weight, bias))
    assert out_c.shape == (batch, num_agents, output_dim)
    assert jnp.allclose(out_c, ref_fn(x_small), atol=1e-2, rtol=1e-2)

    print("KERNEL_OK")
</pallas_src>

<mosaic_0001>
module attributes {stable_mosaic.version = 11 : i64} {
  func.func @_linear_kernel(%arg0: i32, %arg1: memref<128x32xf32, #tpu.memory_space<vmem>>, %arg2: memref<16x32xf32, #tpu.memory_space<vmem>>, %arg3: memref<1x16xf32, #tpu.memory_space<vmem>>, %arg4: memref<128x16xf32, #tpu.memory_space<vmem>>) attributes {dimension_semantics = [#tpu.dimension_semantics<parallel>], iteration_bounds = array<i64: 1>, scalar_prefetch = 0 : i64, scratch_operands = 0 : i64, tpu.core_type = #tpu.core_type<tc>, window_params = [{transform_indices = @transform_0, window_bounds = array<i64: 128, 32>}, {pipeline_mode = #tpu.pipeline_mode<synchronous>, transform_indices = @transform_1, window_bounds = array<i64: 16, 32>}, {pipeline_mode = #tpu.pipeline_mode<synchronous>, transform_indices = @transform_2, window_bounds = array<i64: 1, 16>}, {transform_indices = @transform_3, window_bounds = array<i64: 128, 16>}]} {
    %c0 = arith.constant 0 : index
    %c0_0 = arith.constant 0 : index
    %0 = vector.load %arg1[%c0, %c0_0] : memref<128x32xf32, #tpu.memory_space<vmem>>, vector<128x32xf32>
    %c0_1 = arith.constant 0 : index
    %c0_2 = arith.constant 0 : index
    %1 = vector.load %arg2[%c0_1, %c0_2] : memref<16x32xf32, #tpu.memory_space<vmem>>, vector<16x32xf32>
    %cst = arith.constant dense<0.000000e+00> : vector<128x16xf32>
    %2 = tpu.matmul %0, %1, %cst {dimension_numbers = #tpu.dot_dimension_numbers<[1], [1], [0], [0], [0, 0, 1, 0], [], []>} : vector<128x32xf32>, vector<16x32xf32>, vector<128x16xf32> -> vector<128x16xf32>
    %c0_3 = arith.constant 0 : index
    %c0_4 = arith.constant 0 : index
    %3 = vector.load %arg3[%c0_3, %c0_4] : memref<1x16xf32, #tpu.memory_space<vmem>>, vector<1x16xf32>
    %4 = vector.broadcast %3 : vector<1x16xf32> to vector<128x16xf32>
    %5 = arith.addf %2, %4 : vector<128x16xf32>
    %c0_5 = arith.constant 0 : index
    %c0_6 = arith.constant 0 : index
    %6 = vector.load %arg4[%c0_5, %c0_6] : memref<128x16xf32, #tpu.memory_space<vmem>>, vector<128x16xf32>
    tpu.vector_store %arg4[%c0_5, %c0_6], %5 {strides = array<i32>} : memref<128x16xf32, #tpu.memory_space<vmem>>, vector<128x16xf32>,
    return
  }
  func.func @transform_0(%arg0: i32) -> (i32, i32) {
    %c0_i32 = arith.constant 0 : i32
    %c0_i32_0 = arith.constant 0 : i32
    return %arg0, %c0_i32 : i32, i32
  }
  func.func @transform_1(%arg0: i32) -> (i32, i32) {
    %c0_i32 = arith.constant 0 : i32
    %c0_i32_0 = arith.constant 0 : i32
    %c0_i32_1 = arith.constant 0 : i32
    return %c0_i32, %c0_i32_0 : i32, i32
  }
  func.func @transform_2(%arg0: i32) -> (i32, i32) {
    %c0_i32 = arith.constant 0 : i32
    %c0_i32_0 = arith.constant 0 : i32
    %c0_i32_1 = arith.constant 0 : i32
    return %c0_i32, %c0_i32_0 : i32, i32
  }
  func.func @transform_3(%arg0: i32) -> (i32, i32) {
    %c0_i32 = arith.constant 0 : i32
    %c0_i32_0 = arith.constant 0 : i32
    return %arg0, %c0_i32 : i32, i32
  }
}

</mosaic_0001>

<llo_original>
// kernel: tpu_custom_call.1
$region0: #{tpu_custom_call.1}
  #allocation0 [shape = 'u32[]', space=smem, size = 0x4, offset = 0x4, fixed_abs, tag = 'smem constant byte address 0x4 - core index']
  #allocation1 [shape = 'u32[144,128]{1,0:T(1,128)}', space=vmem, size = 0x12000, scoped, tag = 'internal scratch']
  %s0 = inlined_call_operand.hbm [shape: f32[6,32], index: 0, kind: input, shape index: {}]
  %s1 = inlined_call_operand.hbm [shape: f32[16,32], index: 1, kind: input, shape index: {}]
  %s2 = inlined_call_operand.vmem [shape: f32[1,16], index: 2, kind: input, shape index: {}]
  %s3 = inlined_call_operand.hbm [shape: f32[6,16], index: 3, kind: output, shape index: {}]
  %s4 = sld [smem:[#allocation0]]
  $region30: #{tpu_custom_call.1} parent=0
    _
  %s6 = ssub.s32 1, %s4
  %s7 = scalar_select 0, %s6, %s4
  $region1: #{tpu_custom_call.1} parent=0
    #allocation2 [shape = 'u8[65536]{0}', space=vmem, size = 0x10000, scoped, tag = 'input window, operand 0, single buffered']
    #allocation3 [shape = 's32[1]{0}', space=sflag, size = 0x4, scoped, tag = 'scoped memory for tpu_custom_call.1']
    #allocation4 [shape = 's32[1]{0}', space=sflag, size = 0x4, scoped, tag = 'scoped memory for tpu_custom_call.1']
    #allocation5 [shape = 'u8[8192]{0}', space=vmem, size = 0x2000, scoped, tag = 'input window, operand 1, single buffered']
    #allocation6 [shape = 's32[1]{0}', space=sflag, size = 0x4, scoped, tag = 'scoped memory for tpu_custom_call.1']
    #allocation7 [shape = 'u8[65536]{0}', space=vmem, size = 0x10000, scoped, tag = 'output window, operand 0, single buffered']
    %8 = vsyncpa [#allocation3], 0
    %9 = vsyncpa [#allocation6], 0
    %10 = vsyncpa [#allocation4], 0
    // Predicated region
    $region2: #{tpu_custom_call.1} parent=1 // pred_check
      _
    $region3: #{tpu_custom_call.1} parent=1 // pred_check_branch
      %12 = sbr.rel (0) target = $region5
    $region4: #{tpu_custom_call.1} parent=1 // pred_region
      %s14 = ssub.s32 2048, 128
      %15 = vsyncadd [#allocation3], %s14
      %s16 = sshll.u32 [#allocation2], 4
      %s17 = int_to_ptr.vmem [resolvable:$true] %s16
      %22 = dma.hbm_to_vmem [thread:$0]  %s0, 128, %s17, [#allocation3], 128, 128, 8
    $region5: #{tpu_custom_call.1} parent=1 // pred_fallthru
      _
    // Predicated region
    $region6: #{tpu_custom_call.1} parent=1 // pred_check
      _
    $region7: #{tpu_custom_call.1} parent=1 // pred_check_branch
      %24 = sbr.rel (0) target = $region9
    $region8: #{tpu_custom_call.1} parent=1 // pred_region
      %s26 = ssub.s32 256, 256
      %27 = vsyncadd [#allocation6], %s26
      %s28 = sshll.u32 [#allocation5], 4
      %s29 = int_to_ptr.vmem [resolvable:$true] %s28
      %34 = dma.hbm_to_vmem [thread:$0]  %s1, 256, %s29, [#allocation6], 128, 128, 8
    $region9: #{tpu_custom_call.1} parent=1 // pred_fallthru
      _
    // Predicated region
    $region10: #{tpu_custom_call.1} parent=1 // pred_check
      _
    $region11: #{tpu_custom_call.1} parent=1 // pred_check_branch
      %36 = sbr.rel (0) target = $region13
    $region12: #{tpu_custom_call.1} parent=1 // pred_region
      _
    $region13: #{tpu_custom_call.1} parent=1 // pred_fallthru
      _
    // Predicated region
    $region14: #{tpu_custom_call.1} parent=1 // pred_check
      _
    $region15: #{tpu_custom_call.1} parent=1 // pred_check_branch
      %38 = sbr.rel (0) target = $region17
    $region16: #{tpu_custom_call.1} parent=1 // pred_region
      %39 = dma.done [#allocation3], 2048
    $region17: #{tpu_custom_call.1} parent=1 // pred_fallthru
      _
    // Predicated region
    $region18: #{tpu_custom_call.1} parent=1 // pred_check
      _
    $region19: #{tpu_custom_call.1} parent=1 // pred_check_branch
      %41 = sbr.rel (0) target = $region21
    $region20: #{tpu_custom_call.1} parent=1 // pred_region
      %42 = dma.done [#allocation6], 256
    $region21: #{tpu_custom_call.1} parent=1 // pred_fallthru
      _
    %v43 = vld [vmem:[#allocation2] sm:$0xff]
    %v44 = vld [vmem:[#allocation2 + $0x8] sm:$0xff]
    %v45 = vld [vmem:[#allocation2 + $0x10] sm:$0xff]
    %v46 = vld [vmem:[#allocation2 + $0x18] sm:$0xff]
    %v47 = vld [vmem:[#allocation2 + $0x20] sm:$0xff]
    %v48 = vld [vmem:[#allocation2 + $0x28] sm:$0xff]
    %v49 = vld [vmem:[#allocation2 + $0x30] sm:$0xff]
    %v50 = vld [vmem:[#allocation2 + $0x38] sm:$0xff]
    %v51 = vld [vmem:[#allocation2 + $0x40] sm:$0xff]
    %v52 = vld [vmem:[#allocation2 + $0x48] sm:$0xff]
    %v53 = vld [vmem:[#allocation2 + $0x50] sm:$0xff]
    %v54 = vld [vmem:[#allocation2 + $0x58] sm:$0xff]
    %v55 = vld [vmem:[#allocation2 + $0x60] sm:$0xff]
    %v56 = vld [vmem:[#allocation2 + $0x68] sm:$0xff]
    %v57 = vld [vmem:[#allocation2 + $0x70] sm:$0xff]
    %v58 = vld [vmem:[#allocation2 + $0x78] sm:$0xff]
    %v59 = vld [vmem:[#allocation5] sm:$0xff]
    %v60 = vld [vmem:[#allocation5 + $0x8] sm:$0xff]
    %v61 = vld [vmem:[%s2] sm:$0x1]
    %v63 = vlaneseq
    %v64 = vshrl.u32 %v63, 7
    %v65 = vsub.s32 0, %v64
    %v66 = vrot.slane %v61, %v65
    %vm68 = vcmask 261120
    %v70 = vsel %vm68, %v43, 0
    %v73 = vsel %vm68, %v44, 0
    %v76 = vsel %vm68, %v45, 0
    %v79 = vsel %vm68, %v46, 0
    %v82 = vsel %vm68, %v47, 0
    %v85 = vsel %vm68, %v48, 0
    %v88 = vsel %vm68, %v49, 0
    %v91 = vsel %vm68, %v50, 0
    %v94 = vsel %vm68, %v51, 0
    %v97 = vsel %vm68, %v52, 0
    %v100 = vsel %vm68, %v53, 0
    %v103 = vsel %vm68, %v54, 0
    %v106 = vsel %vm68, %v55, 0
    %v109 = vsel %vm68, %v56, 0
    %v112 = vsel %vm68, %v57, 0
    %v115 = vsel %vm68, %v58, 0
    %v118 = vsel %vm68, %v59, 0
    %v121 = vsel %vm68, %v60, 0
    %123 = vmatprep.subr.mxu0 0.0
    %124 = vmatpush1.xpose.msra.mxu0 %v118
    %125 = vmatprep.subr.mxu0 0.0
    %126 = vmatpush1.xpose.msra.mxu0 %v121
    %127 = vmatprep.subr.mxu0 0.0
    %128 = vmatpush1.xpose.msra.mxu0 0.0
    %129 = vmatprep.subr.mxu0 0.0
    %130 = vmatpush1.xpose.msra.mxu0 0.0
    %131 = vmatprep.subr.mxu0 0.0
    %132 = vmatpush1.xpose.msra.mxu0 0.0
    %133 = vmatprep.subr.mxu0 0.0
    %134 = vmatpush1.xpose.msra.mxu0 0.0
    %135 = vmatprep.subr.mxu0 0.0
    %136 = vmatpush1.xpose.msra.mxu0 0.0
    %137 = vmatprep.subr.mxu0 0.0
    %138 = vmatpush1.xpose.msra.mxu0 0.0
    %139 = vmatprep.subr.mxu0 0.0
    %140 = vmatpush1.xpose.msra.mxu0 0.0
    %141 = vmatprep.subr.mxu0 0.0
    %142 = vmatpush1.xpose.msra.mxu0 0.0
    %143 = vmatprep.subr.mxu0 0.0
    %144 = vmatpush1.xpose.msra.mxu0 0.0
    %145 = vmatprep.subr.mxu0 0.0
    %146 = vmatpush1.xpose.msra.mxu0 0.0
    %147 = vmatprep.subr.mxu0 0.0
    %148 = vmatpush1.xpose.msra.mxu0 0.0
    %149 = vmatprep.subr.mxu0 0.0
    %150 = vmatpush1.xpose.msra.mxu0 0.0
    %151 = vmatprep.subr.mxu0 0.0
    %152 = vmatpush1.xpose.msra.mxu0 0.0
    %153 = vmatprep.subr.mxu0 0.0
    %154 = vmatpush1.xpose.msra.mxu0 0.0
    %155 = vmatprep.subr.mxu0 0.0
    %156 = vmatpush1.xpose.msra.mxu0 0.0
    %157 = vmatprep.subr.mxu0 0.0
    %158 = vmatpush1.xpose.msra.mxu0 0.0
    %159 = vmatprep.subr.mxu0 0.0
    %160 = vmatpush1.xpose.msra.mxu0 0.0
    %161 = vmatprep.subr.mxu0 0.0
    %162 = vmatpush1.xpose.msra.mxu0 0.0
    %163 = vmatprep.subr.mxu0 0.0
    %164 = vmatpush1.xpose.msra.mxu0 0.0
    %165 = vmatprep.subr.mxu0 0.0
    %166 = vmatpush1.xpose.msra.mxu0 0.0
    %167 = vmatprep.subr.mxu0 0.0
    %168 = vmatpush1.xpose.msra.mxu0 0.0
    %169 = vmatprep.subr.mxu0 0.0
    %170 = vmatpush1.xpose.msra.mxu0 0.0
    %171 = vmatprep.subr.mxu0 0.0
    %172 = vmatpush1.xpose.msra.mxu0 0.0
    %173 = vmatprep.subr.mxu0 0.0
    %174 = vmatpush1.xpose.msra.mxu0 0.0
    %175 = vmatprep.subr.mxu0 0.0
    %176 = vmatpush1.xpose.msra.mxu0 0.0
    %177 = vmatprep.subr.mxu0 0.0
    %178 = vmatpush1.xpose.msra.mxu0 0.0
    %179 = vmatprep.subr.mxu0 0.0
    %180 = vmatpush1.xpose.msra.mxu0 0.0
    %181 = vmatprep.subr.mxu0 0.0
    %182 = vmatpush1.xpose.msra.mxu0 0.0
    %183 = vmatprep.subr.mxu0 0.0
    %184 = vmatpush1.xpose.msra.mxu0 0.0
    %185 = vmatprep.subr.mxu0 0.0
    %186 = vmatpush1.xpose.msra.mxu0 0.0
    %187 = vmatprep.mubr.f32.mxu0 0.0
    %188 = vmatmul.mubr.f32.gmra.mrb[0].mxu0 %v70
    %v189 = vpop.f32.mrb[0].mxu0
    %v190 = vadd.f32 %v66, %v189
    %v191 = vpop.f32.mrb[0].mxu0
    %192 = vmatprep.mubr.f32.mxu0 0.0
    %193 = vmatmul.mubr.f32.gmra.mrb[0].mxu0 %v73
    %v194 = vpop.f32.mrb[0].mxu0
    %v195 = vadd.f32 %v66, %v194
    %v196 = vpop.f32.mrb[0].mxu0
    %197 = vmatprep.mubr.f32.mxu0 0.0
    %198 = vmatmul.mubr.f32.gmra.mrb[0].mxu0 %v76
    %v199 = vpop.f32.mrb[0].mxu0
    %v200 = vadd.f32 %v66, %v199
    %v201 = vpop.f32.mrb[0].mxu0
    %202 = vmatprep.mubr.f32.mxu0 0.0
    %203 = vmatmul.mubr.f32.gmra.mrb[0].mxu0 %v79
    %v204 = vpop.f32.mrb[0].mxu0
    %v205 = vadd.f32 %v66, %v204
    %v206 = vpop.f32.mrb[0].mxu0
    %207 = vmatprep.mubr.f32.mxu0 0.0
    %208 = vmatmul.mubr.f32.gmra.mrb[0].mxu0 %v82
    %v209 = vpop.f32.mrb[0].mxu0
    %v210 = vadd.f32 %v66, %v209
    %v211 = vpop.f32.mrb[0].mxu0
    %212 = vmatprep.mubr.f32.mxu0 0.0
    %213 = vmatmul.mubr.f32.gmra.mrb[0].mxu0 %v85
    %v214 = vpop.f32.mrb[0].mxu0
    %v215 = vadd.f32 %v66, %v214
    %v216 = vpop.f32.mrb[0].mxu0
    %217 = vmatprep.mubr.f32.mxu0 0.0
    %218 = vmatmul.mubr.f32.gmra.mrb[0].mxu0 %v88
    %v219 = vpop.f32.mrb[0].mxu0
    %v220 = vadd.f32 %v66, %v219
    %v221 = vpop.f32.mrb[0].mxu0
    %222 = vmatprep.mubr.f32.mxu0 0.0
    %223 = vmatmul.mubr.f32.gmra.mrb[0].mxu0 %v91
    %v224 = vpop.f32.mrb[0].mxu0
    %v225 = vadd.f32 %v66, %v224
    %v226 = vpop.f32.mrb[0].mxu0
    %227 = vmatprep.mubr.f32.mxu0 0.0
    %228 = vmatmul.mubr.f32.gmra.mrb[0].mxu0 %v94
    %v229 = vpop.f32.mrb[0].mxu0
    %v230 = vadd.f32 %v66, %v229
    %v231 = vpop.f32.mrb[0].mxu0
    %232 = vmatprep.mubr.f32.mxu0 0.0
    %233 = vmatmul.mubr.f32.gmra.mrb[0].mxu0 %v97
    %v234 = vpop.f32.mrb[0].mxu0
    %v235 = vadd.f32 %v66, %v234
    %v236 = vpop.f32.mrb[0].mxu0
    %237 = vmatprep.mubr.f32.mxu0 0.0
    %238 = vmatmul.mubr.f32.gmra.mrb[0].mxu0 %v100
    %v239 = vpop.f32.mrb[0].mxu0
    %v240 = vadd.f32 %v66, %v239
    %v241 = vpop.f32.mrb[0].mxu0
    %242 = vmatprep.mubr.f32.mxu0 0.0
    %243 = vmatmul.mubr.f32.gmra.mrb[0].mxu0 %v103
    %v244 = vpop.f32.mrb[0].mxu0
    %v245 = vadd.f32 %v66, %v244
    %v246 = vpop.f32.mrb[0].mxu0
    %247 = vmatprep.mubr.f32.mxu0 0.0
    %248 = vmatmul.mubr.f32.gmra.mrb[0].mxu0 %v106
    %v249 = vpop.f32.mrb[0].mxu0
    %v250 = vadd.f32 %v66, %v249
    %v251 = vpop.f32.mrb[0].mxu0
    %252 = vmatprep.mubr.f32.mxu0 0.0
    %253 = vmatmul.mubr.f32.gmra.mrb[0].mxu0 %v109
    %v254 = vpop.f32.mrb[0].mxu0
    %v255 = vadd.f32 %v66, %v254
    %v256 = vpop.f32.mrb[0].mxu0
    %257 = vmatprep.mubr.f32.mxu0 0.0
    %258 = vmatmul.mubr.f32.gmra.mrb[0].mxu0 %v112
    %v259 = vpop.f32.mrb[0].mxu0
    %v260 = vadd.f32 %v66, %v259
    %v261 = vpop.f32.mrb[0].mxu0
    %262 = vmatprep.mubr.f32.mxu0 0.0
    %263 = vmatmul.mubr.f32.gmra.mrb[0].mxu0 %v115
    %v264 = vpop.f32.mrb[0].mxu0
    %v265 = vadd.f32 %v66, %v264
    %v266 = vpop.f32.mrb[0].mxu0
    %267 = vdwg.mxu0
    %vm268 = vcmask 130048
    %269 = vst.msk [vmem:[#allocation7] sm:$0xff] %vm268, %v190
    %270 = vst.msk [vmem:[#allocation7 + $0x8] sm:$0xff] %vm268, %v195
    %271 = vst.msk [vmem:[#allocation7 + $0x10] sm:$0xff] %vm268, %v200
    %272 = vst.msk [vmem:[#allocation7 + $0x18] sm:$0xff] %vm268, %v205
    %273 = vst.msk [vmem:[#allocation7 + $0x20] sm:$0xff] %vm268, %v210
    %274 = vst.msk [vmem:[#allocation7 + $0x28] sm:$0xff] %vm268, %v215
    %275 = vst.msk [vmem:[#allocation7 + $0x30] sm:$0xff] %vm268, %v220
    %276 = vst.msk [vmem:[#allocation7 + $0x38] sm:$0xff] %vm268, %v225
    %277 = vst.msk [vmem:[#allocation7 + $0x40] sm:$0xff] %vm268, %v230
    %278 = vst.msk [vmem:[#allocation7 + $0x48] sm:$0xff] %vm268, %v235
    %279 = vst.msk [vmem:[#allocation7 + $0x50] sm:$0xff] %vm268, %v240
    %280 = vst.msk [vmem:[#allocation7 + $0x58] sm:$0xff] %vm268, %v245
    %281 = vst.msk [vmem:[#allocation7 + $0x60] sm:$0xff] %vm268, %v250
    %282 = vst.msk [vmem:[#allocation7 + $0x68] sm:$0xff] %vm268, %v255
    %283 = vst.msk [vmem:[#allocation7 + $0x70] sm:$0xff] %vm268, %v260
    %284 = vst.msk [vmem:[#allocation7 + $0x78] sm:$0xff] %vm268, %v265
    // Predicated region
    $region22: #{tpu_custom_call.1} parent=1 // pred_check
      _
    $region23: #{tpu_custom_call.1} parent=1 // pred_check_branch
      %286 = sbr.rel (0) target = $region25
    $region24: #{tpu_custom_call.1} parent=1 // pred_region
      %s288 = ssub.s32 2048, 128
      %289 = vsyncadd [#allocation4], %s288
      %s290 = sshll.u32 [#allocation7], 4
      %s291 = int_to_ptr.vmem [resolvable:$true] %s290
      %296 = dma.vmem_to_hbm [thread:$0]  %s291, 128, %s3, [#allocation4], 128, 128, 8
    $region25: #{tpu_custom_call.1} parent=1 // pred_fallthru
      _
    // Predicated region
    $region26: #{tpu_custom_call.1} parent=1 // pred_check
      _
    $region27: #{tpu_custom_call.1} parent=1 // pred_check_branch
      %298 = sbr.rel (0) target = $region29
    $region28: #{tpu_custom_call.1} parent=1 // pred_region
      %299 = dma.done [#allocation4], 2048
    $region29: #{tpu_custom_call.1} parent=1 // pred_fallthru
      _
    %300 = vsyncpa [#allocation3], 1
    %301 = vsyncpa [#allocation6], 1
    %302 = vsyncpa [#allocation4], 1

</llo_original>
